<compile_context>
chip_gen: v7x
topology: tpu7x:2x2x1
jax: 0.10.0
libtpu: 0.0.40
codegen_flags: <defaults>
</compile_context>

<pallas_src>
import functools

import jax
import jax.numpy as jnp
from jax.experimental import pallas as pl
from jax.experimental.pallas import tpu as pltpu


def _round_up(v: int, m: int) -> int:
    return ((v + m - 1) // m) * m


def _largest_tile(n_pad: int, requested: int) -> int:
    """Largest multiple of 128 that divides n_pad and is <= requested (>= 128)."""
    m = n_pad // 128
    req_d = max(1, requested // 128)
    best = 1
    for d in range(1, m + 1):
        if m % d == 0 and d <= req_d:
            best = d
    return best * 128


def gcn_kernel(x_ref, w_ref, adj_ref, o_ref, acc_ref, *, tk, x_resident):
    """One (row-block i, k-block) step of ReLU(adj @ (x @ W))."""
    k = pl.program_id(1)

    @pl.when(k == 0)
    def _init():
        acc_ref[...] = jnp.zeros_like(acc_ref)

    if x_resident:
        # x is fully resident in VMEM; take the k-slice in-kernel (aligned).
        start = pl.multiple_of(k * tk, tk)
        x_blk = x_ref[pl.ds(start, tk), :]
    else:
        x_blk = x_ref[...]

    # Small x@W in f32 (tiny FLOPs vs adj@support), then cast the support tile
    # down to adj's streaming dtype so the dominant matmul stays on the
    # native-precision MXU path (avoids upcasting the whole adj tile).
    support = jnp.dot(x_blk, w_ref[...], preferred_element_type=jnp.float32)
    support = support.astype(adj_ref.dtype)

    acc_ref[...] += jnp.dot(adj_ref[...], support, preferred_element_type=jnp.float32)

    @pl.when(k == pl.num_programs(1) - 1)
    def _finalize():
        o_ref[...] = jnp.maximum(acc_ref[...], 0.0).astype(o_ref.dtype)


def gcn_layer_pallas(x, w, adj, *, tm=1024, tk=1024):
    """Fused GCN layer: ReLU(adj @ (x @ W)).

    x:   [N, F_in]   (kept in its own dtype, typically f32)
    w:   [F_in, F_out]
    adj: [N, N]      (streamed in its given dtype; pass bf16 adj for the
                      low-precision, HBM-halving path)
    returns [N, F_out] in x's dtype.
    """
    n, f_in = x.shape
    f_in_w, f_out = w.shape
    assert f_in_w == f_in
    assert adj.shape == (n, n)
    assert tm >= 128 and tk >= 128

    out_dtype = x.dtype
    x_bpe = jnp.dtype(x.dtype).itemsize
    w_bpe = jnp.dtype(w.dtype).itemsize
    adj_bpe = jnp.dtype(adj.dtype).itemsize
    out_bpe = jnp.dtype(out_dtype).itemsize

    # Lane-dense output: pad F_out to a multiple of 128 (zero cols -> zero out).
    f_out_p = _round_up(f_out, 128)
    if f_out_p != f_out:
        w = jnp.pad(w, ((0, 0), (0, f_out_p - f_out)))

    # Pad N only to a multiple of 128 (single extra pass only when ragged).
    n_pad = _round_up(n, 128)
    if n_pad != n:
        x = jnp.pad(x, ((0, n_pad - n), (0, 0)))
        adj = jnp.pad(adj, ((0, n_pad - n), (0, n_pad - n)))

    # Tile sizes must divide n_pad; pick largest 128-multiple divisors.
    tm = _largest_tile(n_pad, tm)
    tk = _largest_tile(n_pad, tk)

    # Keep both TensorCores busy on v7x: force grid[0] >= 2 when possible.
    if n_pad // tm < 2 and n_pad >= 256:
        tm = _largest_tile(n_pad, n_pad // 2)

    # Resident x if it comfortably fits VMEM alongside the tile plan.
    x_resident = (n_pad * f_in * x_bpe) <= 8 * 1024 * 1024

    # VMEM budget derived from actual block shapes, capped per generation.
    try:
        vmem_cap = int(pltpu.get_tpu_info().vmem_capacity_bytes)
    except Exception:
        vmem_cap = 64 * 1024 * 1024
    vmem_budget = int(0.75 * vmem_cap)  # ~48 MiB on v7x, ~96 MiB on v5e/v6e

    def _plan_bytes(tm_, tk_):
        x_bytes = (n_pad * f_in * x_bpe) if x_resident else (2 * tk_ * f_in * x_bpe)
        return (2 * tm_ * tk_ * adj_bpe        # adj double buffer (dominant stream)
                + x_bytes                      # x (resident or double-buffered slice)
                + 2 * f_in * f_out_p * w_bpe   # W double buffer
                + 2 * tm_ * f_out_p * out_bpe  # output double buffer
                + tm_ * f_out_p * 4)           # f32 accumulator scratch

    # Shrink tiles (staying divisors of n_pad) if the plan would blow the budget.
    while _plan_bytes(tm, tk) > vmem_budget and max(tm, tk) > 128:
        if tm >= tk:
            tm = _largest_tile(n_pad, tm // 2)
        else:
            tk = _largest_tile(n_pad, tk // 2)

    plan_bytes = _plan_bytes(tm, tk)
    vmem_limit = int(min(vmem_budget, max(plan_bytes + (4 << 20), 32 << 20)))

    grid = (n_pad // tm, n_pad // tk)

    if x_resident:
        x_spec = pl.BlockSpec((n_pad, f_in), lambda i, k: (0, 0))   # one DMA, resident
    else:
        x_spec = pl.BlockSpec((tk, f_in), lambda i, k: (k, 0))      # stream k-slices

    kernel = functools.partial(gcn_kernel, tk=tk, x_resident=x_resident)

    cost = pl.CostEstimate(
        flops=2 * n_pad * n_pad * f_out_p + 2 * grid[0] * n_pad * f_in * f_out_p,
        bytes_accessed=(n_pad * n_pad * adj_bpe
                        + n_pad * f_in * x_bpe
                        + f_in * f_out_p * w_bpe
                        + n_pad * f_out_p * out_bpe),
        transcendentals=0,
    )

    out_padded = pl.pallas_call(
        kernel,
        out_shape=jax.ShapeDtypeStruct((n_pad, f_out_p), out_dtype),
        grid_spec=pltpu.PrefetchScalarGridSpec(
            num_scalar_prefetch=0,
            grid=grid,
            in_specs=[
                x_spec,                                               # x
                pl.BlockSpec((f_in, f_out_p), lambda i, k: (0, 0)),   # W (resident)
                pl.BlockSpec((tm, tk), lambda i, k: (i, k)),          # adj (streamed)
            ],
            out_specs=pl.BlockSpec((tm, f_out_p), lambda i, k: (i, 0)),
            scratch_shapes=[pltpu.VMEM((tm, f_out_p), jnp.float32)],
        ),
        compiler_params=pltpu.CompilerParams(
            dimension_semantics=("parallel", "arbitrary"),
            vmem_limit_bytes=vmem_limit,
        ),
        cost_estimate=cost,
    )(x, w, adj)

    return out_padded[:n, :f_out]


def reference(x, w, adj):
    return jnp.maximum(adj @ (x @ w), 0.0)


if __name__ == "__main__":
    # Small shapes consistent with the module's forward:
    #   x: [N, in_features], adj: [N, N], W: [in_features, out_features]
    N, IN_F, OUT_F = 256, 64, 32

    key = jax.random.PRNGKey(0)
    kx, kadj, kw = jax.random.split(key, 3)

    x = jax.random.normal(kx, (N, IN_F), dtype=jnp.float32)

    # Symmetric, normalized-ish adjacency (synthetic, deterministic).
    a = (jax.random.uniform(kadj, (N, N)) > 0.8).astype(jnp.float32)
    adj = a + a.T + jnp.eye(N, dtype=jnp.float32)
    deg = jnp.sum(adj, axis=1, keepdims=True)
    adj = adj / deg

    # Xavier (Glorot) normal init for W, matching nn.init.xavier_normal_.
    std = (2.0 / (IN_F + OUT_F)) ** 0.5
    w = std * jax.random.normal(kw, (IN_F, OUT_F), dtype=jnp.float32)

    ref = reference(x, w, adj)

    # 1) Default tiles (tiles clamp to the padded problem; grid[0] >= 2), f32 adj.
    out = gcn_layer_pallas(x, w, adj)
    jax.block_until_ready(out)
    assert out.shape == (N, OUT_F)
    assert jnp.allclose(out, ref, atol=1e-4, rtol=1e-4)

    # 2) Small explicit tiles to exercise the multi-step k-reduction / accumulator.
    out_tiled = gcn_layer_pallas(x, w, adj, tm=128, tk=128)
    jax.block_until_ready(out_tiled)
    assert jnp.allclose(out_tiled, ref, atol=1e-4, rtol=1e-4)

    # 3) bf16 adj streaming path (adj handed in bf16, no wrapper re-cast pass);
    #    x/W stay f32, support is cast to bf16 in-kernel, accumulation is f32.
    adj_bf16 = adj.astype(jnp.bfloat16)
    out_bf16 = gcn_layer_pallas(x, w, adj_bf16, tm=128, tk=128)
    jax.block_until_ready(out_bf16)
    assert jnp.allclose(out_bf16, ref, atol=5e-2, rtol=5e-2)

    print("KERNEL_OK")
</pallas_src>

<mosaic_0001>
module attributes {stable_mosaic.version = 11 : i64} {
  func.func @gcn_kernel(%arg0: i32, %arg1: i32, %arg2: memref<256x64xf32, #tpu.memory_space<vmem>>, %arg3: memref<64x128xf32, #tpu.memory_space<vmem>>, %arg4: memref<128x256xf32, #tpu.memory_space<vmem>>, %arg5: memref<128x128xf32, #tpu.memory_space<vmem>>, %arg6: memref<128x128xf32, #tpu.memory_space<vmem>>) attributes {dimension_semantics = [#tpu.dimension_semantics<parallel>, #tpu.dimension_semantics<arbitrary>], iteration_bounds = array<i64: 2, 1>, scalar_prefetch = 0 : i64, scratch_operands = 1 : i64, tpu.core_type = #tpu.core_type<tc>, window_params = [{pipeline_mode = #tpu.pipeline_mode<synchronous>, transform_indices = @transform_0, window_bounds = array<i64: 256, 64>}, {pipeline_mode = #tpu.pipeline_mode<synchronous>, transform_indices = @transform_1, window_bounds = array<i64: 64, 128>}, {transform_indices = @transform_2, window_bounds = array<i64: 128, 256>}, {transform_indices = @transform_3, window_bounds = array<i64: 128, 128>}]} {
    %c0_i32 = arith.constant 0 : i32
    %0 = arith.cmpi eq, %arg1, %c0_i32 : i32
    %1 = arith.extui %0 : i1 to i32
    %c0_i32_0 = arith.constant 0 : i32
    %2 = arith.cmpi ne, %1, %c0_i32_0 : i32
    scf.if %2 {
      %cst_12 = arith.constant 0.000000e+00 : f32
      %17 = vector.broadcast %cst_12 : f32 to vector<128x128xf32>
      %c0_13 = arith.constant 0 : index
      %c0_14 = arith.constant 0 : index
      %18 = vector.load %arg6[%c0_13, %c0_14] : memref<128x128xf32, #tpu.memory_space<vmem>>, vector<128x128xf32>
      tpu.vector_store %arg6[%c0_13, %c0_14], %17 {strides = array<i32>} : memref<128x128xf32, #tpu.memory_space<vmem>>, vector<128x128xf32>,
    } else {
    }
    %c256_i32 = arith.constant 256 : i32
    %3 = arith.muli %arg1, %c256_i32 : i32
    %4 = tpu.assume_multiple %3, 256 : i32
    %5 = arith.index_cast %4 : i32 to index
    %c0 = arith.constant 0 : index
    %6 = vector.load %arg2[%5, %c0] : memref<256x64xf32, #tpu.memory_space<vmem>>, vector<256x64xf32>
    %c0_1 = arith.constant 0 : index
    %c0_2 = arith.constant 0 : index
    %7 = vector.load %arg3[%c0_1, %c0_2] : memref<64x128xf32, #tpu.memory_space<vmem>>, vector<64x128xf32>
    %cst = arith.constant dense<0.000000e+00> : vector<256x128xf32>
    %8 = tpu.matmul %6, %7, %cst {dimension_numbers = #tpu.dot_dimension_numbers<[1], [0], [0], [1], [0, 0, 1, 1], [], []>} : vector<256x64xf32>, vector<64x128xf32>, vector<256x128xf32> -> vector<256x128xf32>
    %c0_3 = arith.constant 0 : index
    %c0_4 = arith.constant 0 : index
    %9 = vector.load %arg6[%c0_3, %c0_4] : memref<128x128xf32, #tpu.memory_space<vmem>>, vector<128x128xf32>
    %c0_5 = arith.constant 0 : index
    %c0_6 = arith.constant 0 : index
    %10 = vector.load %arg4[%c0_5, %c0_6] : memref<128x256xf32, #tpu.memory_space<vmem>>, vector<128x256xf32>
    %cst_7 = arith.constant dense<0.000000e+00> : vector<128x128xf32>
    %11 = tpu.matmul %10, %8, %cst_7 {dimension_numbers = #tpu.dot_dimension_numbers<[1], [0], [0], [1], [0, 0, 1, 1], [], []>} : vector<128x256xf32>, vector<256x128xf32>, vector<128x128xf32> -> vector<128x128xf32>
    %12 = arith.addf %9, %11 : vector<128x128xf32>
    %c0_8 = arith.constant 0 : index
    %c0_9 = arith.constant 0 : index
    %13 = vector.load %arg6[%c0_8, %c0_9] : memref<128x128xf32, #tpu.memory_space<vmem>>, vector<128x128xf32>
    tpu.vector_store %arg6[%c0_8, %c0_9], %12 {strides = array<i32>} : memref<128x128xf32, #tpu.memory_space<vmem>>, vector<128x128xf32>,
    %c0_i32_10 = arith.constant 0 : i32
    %14 = arith.cmpi eq, %arg1, %c0_i32_10 : i32
    %15 = arith.extui %14 : i1 to i32
    %c0_i32_11 = arith.constant 0 : i32
    %16 = arith.cmpi ne, %15, %c0_i32_11 : i32
    scf.if %16 {
      %c0_12 = arith.constant 0 : index
      %c0_13 = arith.constant 0 : index
      %17 = vector.load %arg6[%c0_12, %c0_13] : memref<128x128xf32, #tpu.memory_space<vmem>>, vector<128x128xf32>
      %cst_14 = arith.constant 0.000000e+00 : f32
      %18 = vector.broadcast %cst_14 : f32 to vector<128x128xf32>
      %19 = arith.maximumf %17, %18 : vector<128x128xf32>
      %c0_15 = arith.constant 0 : index
      %c0_16 = arith.constant 0 : index
      %20 = vector.load %arg5[%c0_15, %c0_16] : memref<128x128xf32, #tpu.memory_space<vmem>>, vector<128x128xf32>
      tpu.vector_store %arg5[%c0_15, %c0_16], %19 {strides = array<i32>} : memref<128x128xf32, #tpu.memory_space<vmem>>, vector<128x128xf32>,
    } else {
    }
    return
  }
  func.func @transform_0(%arg0: i32, %arg1: i32) -> (i32, i32) {
    %c0_i32 = arith.constant 0 : i32
    %c0_i32_0 = arith.constant 0 : i32
    %c0_i32_1 = arith.constant 0 : i32
    return %c0_i32, %c0_i32_0 : i32, i32
  }
  func.func @transform_1(%arg0: i32, %arg1: i32) -> (i32, i32) {
    %c0_i32 = arith.constant 0 : i32
    %c0_i32_0 = arith.constant 0 : i32
    %c0_i32_1 = arith.constant 0 : i32
    return %c0_i32, %c0_i32_0 : i32, i32
  }
  func.func @transform_2(%arg0: i32, %arg1: i32) -> (i32, i32) {
    %c0_i32 = arith.constant 0 : i32
    return %arg0, %arg1 : i32, i32
  }
  func.func @transform_3(%arg0: i32, %arg1: i32) -> (i32, i32) {
    %c0_i32 = arith.constant 0 : i32
    %c0_i32_0 = arith.constant 0 : i32
    return %arg0, %c0_i32 : i32, i32
  }
}

</mosaic_0001>

<llo_original>
// kernel: tpu_custom_call.1
$region0: #{tpu_custom_call.1}
  #allocation0 [shape = 'u32[]', space=smem, size = 0x4, offset = 0x4, fixed_abs, tag = 'smem constant byte address 0x4 - core index']
  #allocation1 [shape = 'u32[144,128]{1,0:T(1,128)}', space=vmem, size = 0x12000, scoped, tag = 'internal scratch']
  #allocation2 [shape = 'f32[128,128]{1,0:T(8,128)}', space=vmem, size = 0x10000, scoped, tag = 'scratch operand']
  %s0 = inlined_call_operand.vmem [shape: f32[256,64], index: 0, kind: input, shape index: {}]
  %s1 = inlined_call_operand.vmem [shape: f32[64,128], index: 1, kind: input, shape index: {}]
  %s2 = inlined_call_operand.hbm [shape: f32[256,256], index: 2, kind: input, shape index: {}]
  %s3 = inlined_call_operand.hbm [shape: f32[256,128], index: 3, kind: output, shape index: {}]
  %s4 = sld [smem:[#allocation0]]
  $region57: #{tpu_custom_call.1} parent=0
    _
  %s6 = ssub.s32 1, %s4
  %s7 = scalar_select 0, %s6, %s4
  $region1: #{tpu_custom_call.1} parent=0
    #allocation3 [shape = 'u8[262144]{0}', space=vmem, size = 0x40000, scoped, tag = 'input window, operand 2']
    #allocation4 [shape = 's32[2]{0}', space=sflag, size = 0x8, scoped, tag = 'scoped memory for tpu_custom_call.1']
    #allocation5 [shape = 's32[2]{0}', space=sflag, size = 0x8, scoped, tag = 'scoped memory for tpu_custom_call.1']
    #allocation6 [shape = 'u8[131072]{0}', space=vmem, size = 0x20000, scoped, tag = 'output window, operand 0']
    %8 = vsyncpa [#allocation4], 0
    %s9 = scalar_lea.sflag [#allocation4], 1
    %10 = vsyncpa %s9, 0
    %11 = vsyncpa [#allocation5], 0
    %s12 = scalar_lea.sflag [#allocation5], 1
    %13 = vsyncpa %s12, 0
    loop: start=0, step=1, limit=4
    $region2: #{tpu_custom_call.1} parent=1 // loop_pre_header
      _
    $region3: #{tpu_custom_call.1} parent=1 // loop_header
      %s15 = sphi 0, %s19
      %p16 = scmp.ge.s32.totalorder %s15, 4
      %s22 = sphi 0, %s34
      %s23 = sphi 0, %s30
      %s24 = sphi 0, %s22
      %s25 = sphi 0, %s23
      %s26 = sphi 0, %s24
      %s27 = sphi 0, %s25
      %s35 = sphi 0, %s35
      %s37 = sphi 0, %s35
      %s38 = sphi 0, %s37
      %s52 = sphi 0, %s38
      %s56 = sphi 0, %s56
      %s58 = sphi 0, %s56
      %s59 = sphi 0, %s58
      %s73 = sphi 0, %s59
      %s81 = sphi 0, %s83
      %s84 = sphi 0, %s81
      %s85 = sphi 0, %s84
      %s101 = sphi 0, %s85
      %s107 = sphi 0, %s109
      %s110 = sphi 0, %s107
      %s111 = sphi 0, %s110
      %s127 = sphi 0, %s111
    $region4: #{tpu_custom_call.1} parent=1 // loop_header_branch
      %18 = sbr.rel (%p16) target = $region8
    $region5: #{tpu_custom_call.1} parent=1 // loop_body
      %s20 = ssub.s32 %s15, 1
      %s21 = ssub.s32 %s15, 2
      %s28 = sadd.s32 1, %s23
      %p29 = scmp.ge.s32.totalorder %s28, 1
      %s30 = scalar_select %p29, 0, %s28
      %s31 = sadd.s32 1, %s22
      %s32 = scalar_select %p29, %s31, %s22
      %p33 = scmp.ge.s32.totalorder %s32, 2
      %s34 = scalar_select %p33, 0, %s32
      %s36 = sadd.s32 %s35, 1
      %p39 = scmp.eq.s32.totalorder %s15, 1
      %p40 = scmp.ne.s32.totalorder %s35, %s37
      %p41 = scmp.eq.s32.totalorder %s15, 0
      %p42 = por %p40, %p41
      %p43 = scmp.ne.s32.totalorder %s35, %s37
      %p44 = scmp.eq.s32.totalorder %s20, 1
      %p45 = por %p43, %p44
      %p46 = scmp.ne.s32.totalorder %s37, %s38
      %p47 = scmp.eq.s32.totalorder %s20, 0
      %p48 = por %p46, %p47
      %p49 = scmp.ne.s32.totalorder %s37, %s38
      %p50 = scmp.eq.s32.totalorder %s21, 1
      %p51 = por %p49, %p50
      %p53 = scmp.ne.s32.totalorder %s38, %s52
      %p54 = scmp.eq.s32.totalorder %s21, 0
      %p55 = por %p53, %p54
      %s57 = sadd.s32 %s56, 1
      %p60 = scmp.eq.s32.totalorder %s15, 1
      %p61 = scmp.ne.s32.totalorder %s56, %s58
      %p62 = scmp.eq.s32.totalorder %s15, 0
      %p63 = por %p61, %p62
      %p64 = scmp.ne.s32.totalorder %s56, %s58
      %p65 = scmp.eq.s32.totalorder %s20, 1
      %p66 = por %p64, %p65
      %p67 = scmp.ne.s32.totalorder %s58, %s59
      %p68 = scmp.eq.s32.totalorder %s20, 0
      %p69 = por %p67, %p68
      %p70 = scmp.ne.s32.totalorder %s58, %s59
      %p71 = scmp.eq.s32.totalorder %s21, 1
      %p72 = por %p70, %p71
      %p74 = scmp.ne.s32.totalorder %s59, %s73
      %p75 = scmp.eq.s32.totalorder %s21, 0
      %p76 = por %p74, %p75
      %s77 = ssub.s32 %s22, %s34
      %s78 = ssub.s32 %s23, %s30
      %s79 = sor.u32 %s77, %s78
      %p80 = scmp.eq.s32.totalorder %s79, 0
      %s82 = sadd.s32 %s81, 1
      %s83 = scalar_select %p80, %s81, %s82
      %p86 = pneg %p80
      %p87 = scmp.eq.s32.totalorder %s15, 1
      %p88 = por %p86, %p87
      %p89 = scmp.ne.s32.totalorder %s81, %s84
      %p90 = scmp.eq.s32.totalorder %s15, 0
      %p91 = por %p89, %p90
      %p92 = scmp.ne.s32.totalorder %s81, %s84
      %p93 = scmp.eq.s32.totalorder %s20, 1
      %p94 = por %p92, %p93
      %p95 = scmp.ne.s32.totalorder %s84, %s85
      %p96 = scmp.eq.s32.totalorder %s20, 0
      %p97 = por %p95, %p96
      %p98 = scmp.ne.s32.totalorder %s84, %s85
      %p99 = scmp.eq.s32.totalorder %s21, 1
      %p100 = por %p98, %p99
      %p102 = scmp.ne.s32.totalorder %s85, %s101
      %p103 = scmp.eq.s32.totalorder %s21, 0
      %p104 = por %p102, %p103
      %s105 = ssub.s32 %s22, %s34
      %p106 = scmp.eq.s32.totalorder %s105, 0
      %s108 = sadd.s32 %s107, 1
      %s109 = scalar_select %p106, %s107, %s108
      %p112 = pneg %p106
      %p113 = scmp.eq.s32.totalorder %s15, 1
      %p114 = por %p112, %p113
      %p115 = scmp.ne.s32.totalorder %s107, %s110
      %p116 = scmp.eq.s32.totalorder %s15, 0
      %p117 = por %p115, %p116
      %p118 = scmp.ne.s32.totalorder %s107, %s110
      %p119 = scmp.eq.s32.totalorder %s20, 1
      %p120 = por %p118, %p119
      %p121 = scmp.ne.s32.totalorder %s110, %s111
      %p122 = scmp.eq.s32.totalorder %s20, 0
      %p123 = por %p121, %p122
      %p124 = scmp.ne.s32.totalorder %s110, %s111
      %p125 = scmp.eq.s32.totalorder %s21, 1
      %p126 = por %p124, %p125
      %p128 = scmp.ne.s32.totalorder %s111, %s127
      %p129 = scmp.eq.s32.totalorder %s21, 0
      %p130 = por %p128, %p129
      %p131 = scmp.le.s32.totalorder 1, %s15
      %p132 = scmp.lt.s32.totalorder %s15, 3
      %p133 = pnand %p131, %p132
      %p134 = pneg %p133
      // Predicated region
      $region9: #{tpu_custom_call.1} parent=5 // pred_check
        _
      $region10: #{tpu_custom_call.1} parent=5 // pred_check_branch
        %136 = sbr.rel (%p133) target = $region12
      $region11: #{tpu_custom_call.1} parent=5 // pred_region
        %s137 = ssub.s32 %s15, 1
        // Predicated region
        $region13: #{tpu_custom_call.1} parent=11 // pred_check
          %p138 = pneg %p48
        $region14: #{tpu_custom_call.1} parent=11 // pred_check_branch
          %140 = sbr.rel (%p138) target = $region16
        $region15: #{tpu_custom_call.1} parent=11 // pred_region
          _
        $region16: #{tpu_custom_call.1} parent=11 // pred_fallthru
          _
        // Predicated region
        $region17: #{tpu_custom_call.1} parent=11 // pred_check
          %p141 = pneg %p69
        $region18: #{tpu_custom_call.1} parent=11 // pred_check_branch
          %143 = sbr.rel (%p141) target = $region20
        $region19: #{tpu_custom_call.1} parent=11 // pred_region
          _
        $region20: #{tpu_custom_call.1} parent=11 // pred_fallthru
          _
      $region12: #{tpu_custom_call.1} parent=5 // pred_fallthru
        _
      %p144 = scmp.lt.s32.totalorder %s15, 2
      // Predicated region
      $region21: #{tpu_custom_call.1} parent=5 // pred_check
        %p145 = pneg %p144
      $region22: #{tpu_custom_call.1} parent=5 // pred_check_branch
        %147 = sbr.rel (%p145) target = $region24
      $region23: #{tpu_custom_call.1} parent=5 // pred_region
        // Predicated region
        $region25: #{tpu_custom_call.1} parent=23 // pred_check
          %p148 = pneg %p91
        $region26: #{tpu_custom_call.1} parent=23 // pred_check_branch
          %150 = sbr.rel (%p148) target = $region28
        $region27: #{tpu_custom_call.1} parent=23 // pred_region
          %s151 = sand.u32 %s81, 1
          %s152 = scalar_lea.sflag [#allocation4], %s151
          %s153 = sand.u32 %s81, 1
          %s154 = smul.addr %s153, 256
          %s155 = scalar_lea.vmem [#allocation3], %s154
          %s156 = smul.u32 16, %s22
          %s157 = smul.u32 2, %s23
          %s159 = ssub.s32 4096, 4096
          %160 = vsyncadd %s152, %s159
          %s161 = smul.addr %s156, 2
          %s162 = sadd.s32 %s157, %s161
          %s163 = smul.addr %s162, 128
          %s164 = scalar_lea.hbm %s2, %s163
          %s165 = sshll.u32 %s155, 4
          %s166 = int_to_ptr.vmem [resolvable:$true] %s165
          %171 = dma.hbm_to_vmem [thread:$0]  %s164, 4096, %s166, %s152, 256, 256, 16
        $region28: #{tpu_custom_call.1} parent=23 // pred_fallthru
          _
      $region24: #{tpu_custom_call.1} parent=5 // pred_fallthru
        _
      %p172 = scmp.le.s32.totalorder 1, %s15
      %p173 = scmp.lt.s32.totalorder %s15, 3
      %p174 = pnand %p172, %p173
      %p175 = pneg %p174
      // Predicated region
      $region29: #{tpu_custom_call.1} parent=5 // pred_check
        _
      $region30: #{tpu_custom_call.1} parent=5 // pred_check_branch
        %177 = sbr.rel (%p174) target = $region32
      $region31: #{tpu_custom_call.1} parent=5 // pred_region
        %s178 = ssub.s32 %s15, 1
        %s179 = sand.u32 %s84, 1
        %s180 = scalar_lea.sflag [#allocation4], %s179
        %s181 = sand.u32 %s84, 1
        %s182 = smul.addr %s181, 256
        %s183 = scalar_lea.vmem [#allocation3], %s182
        // Predicated region
        $region33: #{tpu_custom_call.1} parent=31 // pred_check
          %p184 = pneg %p97
        $region34: #{tpu_custom_call.1} parent=31 // pred_check_branch
          %186 = sbr.rel (%p184) target = $region36
        $region35: #{tpu_custom_call.1} parent=31 // pred_region
          %187 = dma.done %s180, 4096
        $region36: #{tpu_custom_call.1} parent=31 // pred_fallthru
          _
        %p188 = pneg %p48
        %p189 = pneg %p45
        %p190 = pneg %p69
        %p191 = pneg %p66
        %s192 = sand.u32 %s84, 1
        %s193 = scalar_lea.sflag [#allocation4], %s192
        %s194 = sand.u32 %s84, 1
        %s195 = smul.addr %s194, 256
        %s196 = scalar_lea.vmem [#allocation3], %s195
        %p197 = pneg %p97
        %p198 = pneg %p94
        %p199 = pneg %p123
        %p200 = pneg %p120
        %s201 = sand.u32 %s110, 1
        %s202 = scalar_lea.sflag [#allocation5], %s201
        %s203 = sand.u32 %s110, 1
        %s204 = smul.addr %s203, 128
        %s205 = scalar_lea.vmem [#allocation6], %s204
        %s206 = smul.u32 16, %s24
        %s207 = smul.u32 2, %s25
        %s208 = smul.u32 16, %s24
        %p209 = scmp.eq.s32.totalorder %s25, 0
        // Predicated region
        $region37: #{tpu_custom_call.1} parent=31 // pred_check
          %p210 = pneg %p209
        $region38: #{tpu_custom_call.1} parent=31 // pred_check_branch
          %212 = sbr.rel (%p210) target = $region40
        $region39: #{tpu_custom_call.1} parent=31 // pred_region
          %213 = vst [vmem:[#allocation2] sm:$0xff] 0.0
          %214 = vst [vmem:[#allocation2 + $0x8] sm:$0xff] 0.0
          %215 = vst [vmem:[#allocation2 + $0x10] sm:$0xff] 0.0
          %216 = vst [vmem:[#allocation2 + $0x18] sm:$0xff] 0.0
          %217 = vst [vmem:[#allocation2 + $0x20] sm:$0xff] 0.0
          %218 = vst [vmem:[#allocation2 + $0x28] sm:$0xff] 0.0
          %219 = vst [vmem:[#allocation2 + $0x30] sm:$0xff] 0.0
          %220 = vst [vmem:[#allocation2 + $0x38] sm:$0xff] 0.0
          %221 = vst [vmem:[#allocation2 + $0x40] sm:$0xff] 0.0
          %222 = vst [vmem:[#allocation2 + $0x48] sm:$0xff] 0.0
          %223 = vst [vmem:[#allocation2 + $0x50] sm:$0xff] 0.0
          %224 = vst [vmem:[#allocation2 + $0x58] sm:$0xff] 0.0
          %225 = vst [vmem:[#allocation2 + $0x60] sm:$0xff] 0.0
          %226 = vst [vmem:[#allocation2 + $0x68] sm:$0xff] 0.0
          %227 = vst [vmem:[#allocation2 + $0x70] sm:$0xff] 0.0
          %228 = vst [vmem:[#allocation2 + $0x78] sm:$0xff] 0.0
        $region40: #{tpu_custom_call.1} parent=31 // pred_fallthru
          _
        %s229 = smul.u32 %s25, 256
        %s230 = scalar_lea.vmem %s0, %s229
        %v231 = vld [vmem:[%s230] sm:$0xff]
        %v232 = vld [vmem:[%s230 + $0x8] sm:$0xff]
        %v233 = vld [vmem:[%s230 + $0x10] sm:$0xff]
        %v234 = vld [vmem:[%s230 + $0x18] sm:$0xff]
        %v235 = vld [vmem:[%s230 + $0x20] sm:$0xff]
        %v236 = vld [vmem:[%s230 + $0x28] sm:$0xff]
        %v237 = vld [vmem:[%s230 + $0x30] sm:$0xff]
        %v238 = vld [vmem:[%s230 + $0x38] sm:$0xff]
        %v239 = vld [vmem:[%s230 + $0x40] sm:$0xff]
        %v240 = vld [vmem:[%s230 + $0x48] sm:$0xff]
        %v241 = vld [vmem:[%s230 + $0x50] sm:$0xff]
        %v242 = vld [vmem:[%s230 + $0x58] sm:$0xff]
        %v243 = vld [vmem:[%s230 + $0x60] sm:$0xff]
        %v244 = vld [vmem:[%s230 + $0x68] sm:$0xff]
        %v245 = vld [vmem:[%s230 + $0x70] sm:$0xff]
        %v246 = vld [vmem:[%s230 + $0x78] sm:$0xff]
        %v247 = vld [vmem:[%s230 + $0x80] sm:$0xff]
        %v248 = vld [vmem:[%s230 + $0x88] sm:$0xff]
        %v249 = vld [vmem:[%s230 + $0x90] sm:$0xff]
        %v250 = vld [vmem:[%s230 + $0x98] sm:$0xff]
        %v251 = vld [vmem:[%s230 + $0xa0] sm:$0xff]
        %v252 = vld [vmem:[%s230 + $0xa8] sm:$0xff]
        %v253 = vld [vmem:[%s230 + $0xb0] sm:$0xff]
        %v254 = vld [vmem:[%s230 + $0xb8] sm:$0xff]
        %v255 = vld [vmem:[%s230 + $0xc0] sm:$0xff]
        %v256 = vld [vmem:[%s230 + $0xc8] sm:$0xff]
        %v257 = vld [vmem:[%s230 + $0xd0] sm:$0xff]
        %v258 = vld [vmem:[%s230 + $0xd8] sm:$0xff]
        %v259 = vld [vmem:[%s230 + $0xe0] sm:$0xff]
        %v260 = vld [vmem:[%s230 + $0xe8] sm:$0xff]
        %v261 = vld [vmem:[%s230 + $0xf0] sm:$0xff]
        %v262 = vld [vmem:[%s230 + $0xf8] sm:$0xff]
        %v263 = vld [vmem:[%s1] sm:$0xff]
        %v264 = vld [vmem:[%s1 + $0x8] sm:$0xff]
        %v265 = vld [vmem:[%s1 + $0x10] sm:$0xff]
        %v266 = vld [vmem:[%s1 + $0x18] sm:$0xff]
        %v267 = vld [vmem:[%s1 + $0x20] sm:$0xff]
        %v268 = vld [vmem:[%s1 + $0x28] sm:$0xff]
        %v269 = vld [vmem:[%s1 + $0x30] sm:$0xff]
        %v270 = vld [vmem:[%s1 + $0x38] sm:$0xff]
        %vm271 = vcmask 523264
        %v273 = vsel %vm271, %v231, 0
        %v276 = vsel %vm271, %v232, 0
        %v279 = vsel %vm271, %v233, 0
        %v282 = vsel %vm271, %v234, 0
        %v285 = vsel %vm271, %v235, 0
        %v288 = vsel %vm271, %v236, 0
        %v291 = vsel %vm271, %v237, 0
        %v294 = vsel %vm271, %v238, 0
        %v297 = vsel %vm271, %v239, 0
        %v300 = vsel %vm271, %v240, 0
        %v303 = vsel %vm271, %v241, 0
        %v306 = vsel %vm271, %v242, 0
        %v309 = vsel %vm271, %v243, 0
        %v312 = vsel %vm271, %v244, 0
        %v315 = vsel %vm271, %v245, 0
        %v318 = vsel %vm271, %v246, 0
        %v321 = vsel %vm271, %v247, 0
        %v324 = vsel %vm271, %v248, 0
        %v327 = vsel %vm271, %v249, 0
        %v330 = vsel %vm271, %v250, 0
        %v333 = vsel %vm271, %v251, 0
        %v336 = vsel %vm271, %v252, 0
        %v339 = vsel %vm271, %v253, 0
        %v342 = vsel %vm271, %v254, 0
        %v345 = vsel %vm271, %v255, 0
        %v348 = vsel %vm271, %v256, 0
        %v351 = vsel %vm271, %v257, 0
        %v354 = vsel %vm271, %v258, 0
        %v357 = vsel %vm271, %v259, 0
        %v360 = vsel %vm271, %v260, 0
        %v363 = vsel %vm271, %v261, 0
        %v366 = vsel %vm271, %v262, 0
        %368 = vmatprep.subr.mxu0 0.0
        %369 = vmatpush1.msra.mxu0 %v263
        %370 = vmatprep.subr.mxu0 0.0
        %371 = vmatpush1.msra.mxu0 %v264
        %372 = vmatprep.subr.mxu0 0.0
        %373 = vmatpush1.msra.mxu0 %v265
        %374 = vmatprep.subr.mxu0 0.0
        %375 = vmatpush1.msra.mxu0 %v266
        %376 = vmatprep.subr.mxu0 0.0
        %377 = vmatpush1.msra.mxu0 %v267
        %378 = vmatprep.subr.mxu0 0.0
        %379 = vmatpush1.msra.mxu0 %v268
        %380 = vmatprep.subr.mxu0 0.0
        %381 = vmatpush1.msra.mxu0 %v269
        %382 = vmatprep.subr.mxu0 0.0
        %383 = vmatpush1.msra.mxu0 %v270
        %384 = vmatprep.subr.mxu0 0.0
        %385 = vmatpush1.msra.mxu0 0.0
        %386 = vmatprep.subr.mxu0 0.0
        %387 = vmatpush1.msra.mxu0 0.0
        %388 = vmatprep.subr.mxu0 0.0
        %389 = vmatpush1.msra.mxu0 0.0
        %390 = vmatprep.subr.mxu0 0.0
        %391 = vmatpush1.msra.mxu0 0.0
        %392 = vmatprep.subr.mxu0 0.0
        %393 = vmatpush1.msra.mxu0 0.0
        %394 = vmatprep.subr.mxu0 0.0
        %395 = vmatpush1.msra.mxu0 0.0
        %396 = vmatprep.subr.mxu0 0.0
        %397 = vmatpush1.msra.mxu0 0.0
        %398 = vmatprep.subr.mxu0 0.0
        %399 = vmatpush1.msra.mxu0 0.0
        %400 = vmatprep.subr.mxu0 0.0
        %401 = vmatpush1.msra.mxu0 0.0
        %402 = vmatprep.subr.mxu0 0.0
        %403 = vmatpush1.msra.mxu0 0.0
        %404 = vmatprep.subr.mxu0 0.0
        %405 = vmatpush1.msra.mxu0 0.0
        %406 = vmatprep.subr.mxu0 0.0
        %407 = vmatpush1.msra.mxu0 0.0
        %408 = vmatprep.subr.mxu0 0.0
        %409 = vmatpush1.msra.mxu0 0.0
        %410 = vmatprep.subr.mxu0 0.0
        %411 = vmatpush1.msra.mxu0 0.0
        %412 = vmatprep.subr.mxu0 0.0
        %413 = vmatpush1.msra.mxu0 0.0
        %414 = vmatprep.subr.mxu0 0.0
        %415 = vmatpush1.msra.mxu0 0.0
        %416 = vmatprep.subr.mxu0 0.0
        %417 = vmatpush1.msra.mxu0 0.0
        %418 = vmatprep.subr.mxu0 0.0
        %419 = vmatpush1.msra.mxu0 0.0
        %420 = vmatprep.subr.mxu0 0.0
        %421 = vmatpush1.msra.mxu0 0.0
        %422 = vmatprep.subr.mxu0 0.0
        %423 = vmatpush1.msra.mxu0 0.0
        %424 = vmatprep.subr.mxu0 0.0
        %425 = vmatpush1.msra.mxu0 0.0
        %426 = vmatprep.subr.mxu0 0.0
        %427 = vmatpush1.msra.mxu0 0.0
        %428 = vmatprep.subr.mxu0 0.0
        %429 = vmatpush1.msra.mxu0 0.0
        %430 = vmatprep.subr.mxu0 0.0
        %431 = vmatpush1.msra.mxu0 0.0
        %432 = vmatprep.mubr.f32.mxu0 0.0
        %433 = vmatmul.mubr.f32.gmra.mrb[0].mxu0 %v273
        %v434 = vpop.f32.mrb[0].mxu0
        %v435 = vadd.f32 0.0, %v434
        %v436 = vpop.f32.mrb[0].mxu0
        %437 = vmatprep.mubr.f32.mxu0 0.0
        %438 = vmatmul.mubr.f32.gmra.mrb[0].mxu0 %v276
        %v439 = vpop.f32.mrb[0].mxu0
        %v440 = vadd.f32 0.0, %v439
        %v441 = vpop.f32.mrb[0].mxu0
        %442 = vmatprep.mubr.f32.mxu0 0.0
        %443 = vmatmul.mubr.f32.gmra.mrb[0].mxu0 %v279
        %v444 = vpop.f32.mrb[0].mxu0
        %v445 = vadd.f32 0.0, %v444
        %v446 = vpop.f32.mrb[0].mxu0
        %447 = vmatprep.mubr.f32.mxu0 0.0
        %448 = vmatmul.mubr.f32.gmra.mrb[0].mxu0 %v282
        %v449 = vpop.f32.mrb[0].mxu0
        %v450 = vadd.f32 0.0, %v449
        %v451 = vpop.f32.mrb[0].mxu0
        %452 = vmatprep.mubr.f32.mxu0 0.0
        %453 = vmatmul.mubr.f32.gmra.mrb[0].mxu0 %v285
        %v454 = vpop.f32.mrb[0].mxu0
        %v455 = vadd.f32 0.0, %v454
        %v456 = vpop.f32.mrb[0].mxu0
        %457 = vmatprep.mubr.f32.mxu0 0.0
        %458 = vmatmul.mubr.f32.gmra.mrb[0].mxu0 %v288
        %v459 = vpop.f32.mrb[0].mxu0
        %v460 = vadd.f32 0.0, %v459
        %v461 = vpop.f32.mrb[0].mxu0
        %462 = vmatprep.mubr.f32.mxu0 0.0
        %463 = vmatmul.mubr.f32.gmra.mrb[0].mxu0 %v291
        %v464 = vpop.f32.mrb[0].mxu0
        %v465 = vadd.f32 0.0, %v464
        %v466 = vpop.f32.mrb[0].mxu0
        %467 = vmatprep.mubr.f32.mxu0 0.0
        %468 = vmatmul.mubr.f32.gmra.mrb[0].mxu0 %v294
        %v469 = vpop.f32.mrb[0].mxu0
        %v470 = vadd.f32 0.0, %v469
        %v471 = vpop.f32.mrb[0].mxu0
        %472 = vmatprep.mubr.f32.mxu0 0.0
        %473 = vmatmul.mubr.f32.gmra.mrb[0].mxu0 %v297
        %v474 = vpop.f32.mrb[0].mxu0
        %v475 = vadd.f32 0.0, %v474
        %v476 = vpop.f32.mrb[0].mxu0
        %477 = vmatprep.mubr.f32.mxu0 0.0
        %478 = vmatmul.mubr.f32.gmra.mrb[0].mxu0 %v300
        %v479 = vpop.f32.mrb[0].mxu0
        %v480 = vadd.f32 0.0, %v479
        %v481 = vpop.f32.mrb[0].mxu0
        %482 = vmatprep.mubr.f32.mxu0 0.0
        %483 = vmatmul.mubr.f32.gmra.mrb[0].mxu0 %v303
        %v484 = vpop.f32.mrb[0].mxu0
        %v485 = vadd.f32 0.0, %v484
        %v486 = vpop.f32.mrb[0].mxu0
        %487 = vmatprep.mubr.f32.mxu0 0.0
        %488 = vmatmul.mubr.f32.gmra.mrb[0].mxu0 %v306
        %v489 = vpop.f32.mrb[0].mxu0
        %v490 = vadd.f32 0.0, %v489
        %v491 = vpop.f32.mrb[0].mxu0
        %492 = vmatprep.mubr.f32.mxu0 0.0
        %493 = vmatmul.mubr.f32.gmra.mrb[0].mxu0 %v309
        %v494 = vpop.f32.mrb[0].mxu0
        %v495 = vadd.f32 0.0, %v494
        %v496 = vpop.f32.mrb[0].mxu0
        %497 = vmatprep.mubr.f32.mxu0 0.0
        %498 = vmatmul.mubr.f32.gmra.mrb[0].mxu0 %v312
        %v499 = vpop.f32.mrb[0].mxu0
        %v500 = vadd.f32 0.0, %v499
        %v501 = vpop.f32.mrb[0].mxu0
        %502 = vmatprep.mubr.f32.mxu0 0.0
        %503 = vmatmul.mubr.f32.gmra.mrb[0].mxu0 %v315
        %v504 = vpop.f32.mrb[0].mxu0
        %v505 = vadd.f32 0.0, %v504
        %v506 = vpop.f32.mrb[0].mxu0
        %507 = vmatprep.mubr.f32.mxu0 0.0
        %508 = vmatmul.mubr.f32.gmra.mrb[0].mxu0 %v318
        %v509 = vpop.f32.mrb[0].mxu0
        %v510 = vadd.f32 0.0, %v509
        %v511 = vpop.f32.mrb[0].mxu0
        %512 = vmatprep.mubr.f32.mxu0 0.0
        %513 = vmatmul.mubr.f32.gmra.mrb[0].mxu0 %v321
        %v514 = vpop.f32.mrb[0].mxu0
        %v515 = vadd.f32 0.0, %v514
        %v516 = vpop.f32.mrb[0].mxu0
        %517 = vmatprep.mubr.f32.mxu0 0.0
        %518 = vmatmul.mubr.f32.gmra.mrb[0].mxu0 %v324
        %v519 = vpop.f32.mrb[0].mxu0
        %v520 = vadd.f32 0.0, %v519
        %v521 = vpop.f32.mrb[0].mxu0
        %522 = vmatprep.mubr.f32.mxu0 0.0
        %523 = vmatmul.mubr.f32.gmra.mrb[0].mxu0 %v327
        %v524 = vpop.f32.mrb[0].mxu0
        %v525 = vadd.f32 0.0, %v524
        %v526 = vpop.f32.mrb[0].mxu0
        %527 = vmatprep.mubr.f32.mxu0 0.0
        %528 = vmatmul.mubr.f32.gmra.mrb[0].mxu0 %v330
        %v529 = vpop.f32.mrb[0].mxu0
        %v530 = vadd.f32 0.0, %v529
        %v531 = vpop.f32.mrb[0].mxu0
        %532 = vmatprep.mubr.f32.mxu0 0.0
        %533 = vmatmul.mubr.f32.gmra.mrb[0].mxu0 %v333
        %v534 = vpop.f32.mrb[0].mxu0
        %v535 = vadd.f32 0.0, %v534
        %v536 = vpop.f32.mrb[0].mxu0
        %537 = vmatprep.mubr.f32.mxu0 0.0
        %538 = vmatmul.mubr.f32.gmra.mrb[0].mxu0 %v336
        %v539 = vpop.f32.mrb[0].mxu0
        %v540 = vadd.f32 0.0, %v539
        %v541 = vpop.f32.mrb[0].mxu0
        %542 = vmatprep.mubr.f32.mxu0 0.0
        %543 = vmatmul.mubr.f32.gmra.mrb[0].mxu0 %v339
        %v544 = vpop.f32.mrb[0].mxu0
        %v545 = vadd.f32 0.0, %v544
        %v546 = vpop.f32.mrb[0].mxu0
        %547 = vmatprep.mubr.f32.mxu0 0.0
        %548 = vmatmul.mubr.f32.gmra.mrb[0].mxu0 %v342
        %v549 = vpop.f32.mrb[0].mxu0
        %v550 = vadd.f32 0.0, %v549
        %v551 = vpop.f32.mrb[0].mxu0
        %552 = vmatprep.mubr.f32.mxu0 0.0
        %553 = vmatmul.mubr.f32.gmra.mrb[0].mxu0 %v345
        %v554 = vpop.f32.mrb[0].mxu0
        %v555 = vadd.f32 0.0, %v554
        %v556 = vpop.f32.mrb[0].mxu0
        %557 = vmatprep.mubr.f32.mxu0 0.0
        %558 = vmatmul.mubr.f32.gmra.mrb[0].mxu0 %v348
        %v559 = vpop.f32.mrb[0].mxu0
        %v560 = vadd.f32 0.0, %v559
        %v561 = vpop.f32.mrb[0].mxu0
        %562 = vmatprep.mubr.f32.mxu0 0.0
        %563 = vmatmul.mubr.f32.gmra.mrb[0].mxu0 %v351
        %v564 = vpop.f32.mrb[0].mxu0
        %v565 = vadd.f32 0.0, %v564
        %v566 = vpop.f32.mrb[0].mxu0
        %567 = vmatprep.mubr.f32.mxu0 0.0
        %568 = vmatmul.mubr.f32.gmra.mrb[0].mxu0 %v354
        %v569 = vpop.f32.mrb[0].mxu0
        %v570 = vadd.f32 0.0, %v569
        %v571 = vpop.f32.mrb[0].mxu0
        %572 = vmatprep.mubr.f32.mxu0 0.0
        %573 = vmatmul.mubr.f32.gmra.mrb[0].mxu0 %v357
        %v574 = vpop.f32.mrb[0].mxu0
        %v575 = vadd.f32 0.0, %v574
        %v576 = vpop.f32.mrb[0].mxu0
        %577 = vmatprep.mubr.f32.mxu0 0.0
        %578 = vmatmul.mubr.f32.gmra.mrb[0].mxu0 %v360
        %v579 = vpop.f32.mrb[0].mxu0
        %v580 = vadd.f32 0.0, %v579
        %v581 = vpop.f32.mrb[0].mxu0
        %582 = vmatprep.mubr.f32.mxu0 0.0
        %583 = vmatmul.mubr.f32.gmra.mrb[0].mxu0 %v363
        %v584 = vpop.f32.mrb[0].mxu0
        %v585 = vadd.f32 0.0, %v584
        %v586 = vpop.f32.mrb[0].mxu0
        %587 = vmatprep.mubr.f32.mxu0 0.0
        %588 = vmatmul.mubr.f32.gmra.mrb[0].mxu0 %v366
        %v589 = vpop.f32.mrb[0].mxu0
        %v590 = vadd.f32 0.0, %v589
        %v591 = vpop.f32.mrb[0].mxu0
        %592 = vdwg.mxu0
        %v593 = vld [vmem:[#allocation2] sm:$0xff]
        %v594 = vld [vmem:[#allocation2 + $0x8] sm:$0xff]
        %v595 = vld [vmem:[#allocation2 + $0x10] sm:$0xff]
        %v596 = vld [vmem:[#allocation2 + $0x18] sm:$0xff]
        %v597 = vld [vmem:[#allocation2 + $0x20] sm:$0xff]
        %v598 = vld [vmem:[#allocation2 + $0x28] sm:$0xff]
        %v599 = vld [vmem:[#allocation2 + $0x30] sm:$0xff]
        %v600 = vld [vmem:[#allocation2 + $0x38] sm:$0xff]
        %v601 = vld [vmem:[#allocation2 + $0x40] sm:$0xff]
        %v602 = vld [vmem:[#allocation2 + $0x48] sm:$0xff]
        %v603 = vld [vmem:[#allocation2 + $0x50] sm:$0xff]
        %v604 = vld [vmem:[#allocation2 + $0x58] sm:$0xff]
        %v605 = vld [vmem:[#allocation2 + $0x60] sm:$0xff]
        %v606 = vld [vmem:[#allocation2 + $0x68] sm:$0xff]
        %v607 = vld [vmem:[#allocation2 + $0x70] sm:$0xff]
        %v608 = vld [vmem:[#allocation2 + $0x78] sm:$0xff]
        %v609 = vld [vmem:[%s183] sm:$0xff]
        %v610 = vld [vmem:[%s183 + $0x8] sm:$0xff]
        %v611 = vld [vmem:[%s183 + $0x10] sm:$0xff]
        %v612 = vld [vmem:[%s183 + $0x18] sm:$0xff]
        %v613 = vld [vmem:[%s183 + $0x20] sm:$0xff]
        %v614 = vld [vmem:[%s183 + $0x28] sm:$0xff]
        %v615 = vld [vmem:[%s183 + $0x30] sm:$0xff]
        %v616 = vld [vmem:[%s183 + $0x38] sm:$0xff]
        %v617 = vld [vmem:[%s183 + $0x40] sm:$0xff]
        %v618 = vld [vmem:[%s183 + $0x48] sm:$0xff]
        %v619 = vld [vmem:[%s183 + $0x50] sm:$0xff]
        %v620 = vld [vmem:[%s183 + $0x58] sm:$0xff]
        %v621 = vld [vmem:[%s183 + $0x60] sm:$0xff]
        %v622 = vld [vmem:[%s183 + $0x68] sm:$0xff]
        %v623 = vld [vmem:[%s183 + $0x70] sm:$0xff]
        %v624 = vld [vmem:[%s183 + $0x78] sm:$0xff]
        %v625 = vld [vmem:[%s183 + $0x80] sm:$0xff]
        %v626 = vld [vmem:[%s183 + $0x88] sm:$0xff]
        %v627 = vld [vmem:[%s183 + $0x90] sm:$0xff]
        %v628 = vld [vmem:[%s183 + $0x98] sm:$0xff]
        %v629 = vld [vmem:[%s183 + $0xa0] sm:$0xff]
        %v630 = vld [vmem:[%s183 + $0xa8] sm:$0xff]
        %v631 = vld [vmem:[%s183 + $0xb0] sm:$0xff]
        %v632 = vld [vmem:[%s183 + $0xb8] sm:$0xff]
        %v633 = vld [vmem:[%s183 + $0xc0] sm:$0xff]
        %v634 = vld [vmem:[%s183 + $0xc8] sm:$0xff]
        %v635 = vld [vmem:[%s183 + $0xd0] sm:$0xff]
        %v636 = vld [vmem:[%s183 + $0xd8] sm:$0xff]
        %v637 = vld [vmem:[%s183 + $0xe0] sm:$0xff]
        %v638 = vld [vmem:[%s183 + $0xe8] sm:$0xff]
        %v639 = vld [vmem:[%s183 + $0xf0] sm:$0xff]
        %v640 = vld [vmem:[%s183 + $0xf8] sm:$0xff]
        %641 = vmatprep.subr.mxu0 0.0
        %642 = vmatpush1.msra.mxu0 %v435
        %643 = vmatprep.subr.mxu0 0.0
        %644 = vmatpush1.msra.mxu0 %v440
        %645 = vmatprep.subr.mxu0 0.0
        %646 = vmatpush1.msra.mxu0 %v445
        %647 = vmatprep.subr.mxu0 0.0
        %648 = vmatpush1.msra.mxu0 %v450
        %649 = vmatprep.subr.mxu0 0.0
        %650 = vmatpush1.msra.mxu0 %v455
        %651 = vmatprep.subr.mxu0 0.0
        %652 = vmatpush1.msra.mxu0 %v460
        %653 = vmatprep.subr.mxu0 0.0
        %654 = vmatpush1.msra.mxu0 %v465
        %655 = vmatprep.subr.mxu0 0.0
        %656 = vmatpush1.msra.mxu0 %v470
        %657 = vmatprep.subr.mxu0 0.0
        %658 = vmatpush1.msra.mxu0 %v475
        %659 = vmatprep.subr.mxu0 0.0
        %660 = vmatpush1.msra.mxu0 %v480
        %661 = vmatprep.subr.mxu0 0.0
        %662 = vmatpush1.msra.mxu0 %v485
        %663 = vmatprep.subr.mxu0 0.0
        %664 = vmatpush1.msra.mxu0 %v490
        %665 = vmatprep.subr.mxu0 0.0
        %666 = vmatpush1.msra.mxu0 %v495
        %667 = vmatprep.subr.mxu0 0.0
        %668 = vmatpush1.msra.mxu0 %v500
        %669 = vmatprep.subr.mxu0 0.0
        %670 = vmatpush1.msra.mxu0 %v505
        %671 = vmatprep.subr.mxu0 0.0
        %672 = vmatpush1.msra.mxu0 %v510
        %673 = vmatprep.subr.mxu0 0.0
        %674 = vmatpush1.msra.mxu0 %v515
        %675 = vmatprep.subr.mxu0 0.0
        %676 = vmatpush1.msra.mxu0 %v520
        %677 = vmatprep.subr.mxu0 0.0
        %678 = vmatpush1.msra.mxu0 %v525
        %679 = vmatprep.subr.mxu0 0.0
        %680 = vmatpush1.msra.mxu0 %v530
        %681 = vmatprep.subr.mxu0 0.0
        %682 = vmatpush1.msra.mxu0 %v535
        %683 = vmatprep.subr.mxu0 0.0
        %684 = vmatpush1.msra.mxu0 %v540
        %685 = vmatprep.subr.mxu0 0.0
        %686 = vmatpush1.msra.mxu0 %v545
        %687 = vmatprep.subr.mxu0 0.0
        %688 = vmatpush1.msra.mxu0 %v550
        %689 = vmatprep.subr.mxu0 0.0
        %690 = vmatpush1.msra.mxu0 %v555
        %691 = vmatprep.subr.mxu0 0.0
        %692 = vmatpush1.msra.mxu0 %v560
        %693 = vmatprep.subr.mxu0 0.0
        %694 = vmatpush1.msra.mxu0 %v565
        %695 = vmatprep.subr.mxu0 0.0
        %696 = vmatpush1.msra.mxu0 %v570
        %697 = vmatprep.subr.mxu0 0.0
        %698 = vmatpush1.msra.mxu0 %v575
        %699 = vmatprep.subr.mxu0 0.0
        %700 = vmatpush1.msra.mxu0 %v580
        %701 = vmatprep.subr.mxu0 0.0
        %702 = vmatpush1.msra.mxu0 %v585
        %703 = vmatprep.subr.mxu0 0.0
        %704 = vmatpush1.msra.mxu0 %v590
        %705 = vmatprep.mubr.f32.mxu0 %v610
        %706 = vmatmul.mubr.f32.gmra.mrb[0].mxu0 %v609
        %v707 = vpop.f32.mrb[0].mxu0
        %v708 = vadd.f32 0.0, %v707
        %v709 = vpop.f32.mrb[0].mxu0
        %710 = vmatprep.mubr.f32.mxu0 %v612
        %711 = vmatmul.mubr.f32.gmra.mrb[0].mxu0 %v611
        %v712 = vpop.f32.mrb[0].mxu0
        %v713 = vadd.f32 0.0, %v712
        %v714 = vpop.f32.mrb[0].mxu0
        %715 = vmatprep.mubr.f32.mxu0 %v614
        %716 = vmatmul.mubr.f32.gmra.mrb[0].mxu0 %v613
        %v717 = vpop.f32.mrb[0].mxu0
        %v718 = vadd.f32 0.0, %v717
        %v719 = vpop.f32.mrb[0].mxu0
        %720 = vmatprep.mubr.f32.mxu0 %v616
        %721 = vmatmul.mubr.f32.gmra.mrb[0].mxu0 %v615
        %v722 = vpop.f32.mrb[0].mxu0
        %v723 = vadd.f32 0.0, %v722
        %v724 = vpop.f32.mrb[0].mxu0
        %725 = vmatprep.mubr.f32.mxu0 %v618
        %726 = vmatmul.mubr.f32.gmra.mrb[0].mxu0 %v617
        %v727 = vpop.f32.mrb[0].mxu0
        %v728 = vadd.f32 0.0, %v727
        %v729 = vpop.f32.mrb[0].mxu0
        %730 = vmatprep.mubr.f32.mxu0 %v620
        %731 = vmatmul.mubr.f32.gmra.mrb[0].mxu0 %v619
        %v732 = vpop.f32.mrb[0].mxu0
        %v733 = vadd.f32 0.0, %v732
        %v734 = vpop.f32.mrb[0].mxu0
        %735 = vmatprep.mubr.f32.mxu0 %v622
        %736 = vmatmul.mubr.f32.gmra.mrb[0].mxu0 %v621
        %v737 = vpop.f32.mrb[0].mxu0
        %v738 = vadd.f32 0.0, %v737
        %v739 = vpop.f32.mrb[0].mxu0
        %740 = vmatprep.mubr.f32.mxu0 %v624
        %741 = vmatmul.mubr.f32.gmra.mrb[0].mxu0 %v623
        %v742 = vpop.f32.mrb[0].mxu0
        %v743 = vadd.f32 0.0, %v742
        %v744 = vpop.f32.mrb[0].mxu0
        %745 = vmatprep.mubr.f32.mxu0 %v626
        %746 = vmatmul.mubr.f32.gmra.mrb[0].mxu0 %v625
        %v747 = vpop.f32.mrb[0].mxu0
        %v748 = vadd.f32 0.0, %v747
        %v749 = vpop.f32.mrb[0].mxu0
        %750 = vmatprep.mubr.f32.mxu0 %v628
        %751 = vmatmul.mubr.f32.gmra.mrb[0].mxu0 %v627
        %v752 = vpop.f32.mrb[0].mxu0
        %v753 = vadd.f32 0.0, %v752
        %v754 = vpop.f32.mrb[0].mxu0
        %755 = vmatprep.mubr.f32.mxu0 %v630
        %756 = vmatmul.mubr.f32.gmra.mrb[0].mxu0 %v629
        %v757 = vpop.f32.mrb[0].mxu0
        %v758 = vadd.f32 0.0, %v757
        %v759 = vpop.f32.mrb[0].mxu0
        %760 = vmatprep.mubr.f32.mxu0 %v632
        %761 = vmatmul.mubr.f32.gmra.mrb[0].mxu0 %v631
        %v762 = vpop.f32.mrb[0].mxu0
        %v763 = vadd.f32 0.0, %v762
        %v764 = vpop.f32.mrb[0].mxu0
        %765 = vmatprep.mubr.f32.mxu0 %v634
        %766 = vmatmul.mubr.f32.gmra.mrb[0].mxu0 %v633
        %v767 = vpop.f32.mrb[0].mxu0
        %v768 = vadd.f32 0.0, %v767
        %v769 = vpop.f32.mrb[0].mxu0
        %770 = vmatprep.mubr.f32.mxu0 %v636
        %771 = vmatmul.mubr.f32.gmra.mrb[0].mxu0 %v635
        %v772 = vpop.f32.mrb[0].mxu0
        %v773 = vadd.f32 0.0, %v772
        %v774 = vpop.f32.mrb[0].mxu0
        %775 = vmatprep.mubr.f32.mxu0 %v638
        %776 = vmatmul.mubr.f32.gmra.mrb[0].mxu0 %v637
        %v777 = vpop.f32.mrb[0].mxu0
        %v778 = vadd.f32 0.0, %v777
        %v779 = vpop.f32.mrb[0].mxu0
        %780 = vmatprep.mubr.f32.mxu0 %v640
        %781 = vmatmul.mubr.f32.gmra.mrb[0].mxu0 %v639
        %v782 = vpop.f32.mrb[0].mxu0
        %v783 = vadd.f32 0.0, %v782
        %v784 = vpop.f32.mrb[0].mxu0
        %785 = vdwg.mxu0
        %v786 = vadd.f32 %v593, %v708
        %v787 = vadd.f32 %v594, %v713
        %v788 = vadd.f32 %v595, %v718
        %v789 = vadd.f32 %v596, %v723
        %v790 = vadd.f32 %v597, %v728
        %v791 = vadd.f32 %v598, %v733
        %v792 = vadd.f32 %v599, %v738
        %v793 = vadd.f32 %v600, %v743
        %v794 = vadd.f32 %v601, %v748
        %v795 = vadd.f32 %v602, %v753
        %v796 = vadd.f32 %v603, %v758
        %v797 = vadd.f32 %v604, %v763
        %v798 = vadd.f32 %v605, %v768
        %v799 = vadd.f32 %v606, %v773
        %v800 = vadd.f32 %v607, %v778
        %v801 = vadd.f32 %v608, %v783
        %802 = vst [vmem:[#allocation2] sm:$0xff] %v786
        %803 = vst [vmem:[#allocation2 + $0x8] sm:$0xff] %v787
        %804 = vst [vmem:[#allocation2 + $0x10] sm:$0xff] %v788
        %805 = vst [vmem:[#allocation2 + $0x18] sm:$0xff] %v789
        %806 = vst [vmem:[#allocation2 + $0x20] sm:$0xff] %v790
        %807 = vst [vmem:[#allocation2 + $0x28] sm:$0xff] %v791
        %808 = vst [vmem:[#allocation2 + $0x30] sm:$0xff] %v792
        %809 = vst [vmem:[#allocation2 + $0x38] sm:$0xff] %v793
        %810 = vst [vmem:[#allocation2 + $0x40] sm:$0xff] %v794
        %811 = vst [vmem:[#allocation2 + $0x48] sm:$0xff] %v795
        %812 = vst [vmem:[#allocation2 + $0x50] sm:$0xff] %v796
        %813 = vst [vmem:[#allocation2 + $0x58] sm:$0xff] %v797
        %814 = vst [vmem:[#allocation2 + $0x60] sm:$0xff] %v798
        %815 = vst [vmem:[#allocation2 + $0x68] sm:$0xff] %v799
        %816 = vst [vmem:[#allocation2 + $0x70] sm:$0xff] %v800
        %817 = vst [vmem:[#allocation2 + $0x78] sm:$0xff] %v801
        // Predicated region
        $region41: #{tpu_custom_call.1} parent=31 // pred_check
          %p818 = pneg %p209
        $region42: #{tpu_custom_call.1} parent=31 // pred_check_branch
          %820 = sbr.rel (%p818) target = $region44
        $region43: #{tpu_custom_call.1} parent=31 // pred_region
          %v821 = vld [vmem:[#allocation2] sm:$0xff]
          %v822 = vld [vmem:[#allocation2 + $0x8] sm:$0xff]
          %v823 = vld [vmem:[#allocation2 + $0x10] sm:$0xff]
          %v824 = vld [vmem:[#allocation2 + $0x18] sm:$0xff]
          %v825 = vld [vmem:[#allocation2 + $0x20] sm:$0xff]
          %v826 = vld [vmem:[#allocation2 + $0x28] sm:$0xff]
          %v827 = vld [vmem:[#allocation2 + $0x30] sm:$0xff]
          %v828 = vld [vmem:[#allocation2 + $0x38] sm:$0xff]
          %v829 = vld [vmem:[#allocation2 + $0x40] sm:$0xff]
          %v830 = vld [vmem:[#allocation2 + $0x48] sm:$0xff]
          %v831 = vld [vmem:[#allocation2 + $0x50] sm:$0xff]
          %v832 = vld [vmem:[#allocation2 + $0x58] sm:$0xff]
          %v833 = vld [vmem:[#allocation2 + $0x60] sm:$0xff]
          %v834 = vld [vmem:[#allocation2 + $0x68] sm:$0xff]
          %v835 = vld [vmem:[#allocation2 + $0x70] sm:$0xff]
          %v836 = vld [vmem:[#allocation2 + $0x78] sm:$0xff]
          %v837 = vmax.f32 %v821, 0.0
          %v838 = vmax.f32 %v822, 0.0
          %v839 = vmax.f32 %v823, 0.0
          %v840 = vmax.f32 %v824, 0.0
          %v841 = vmax.f32 %v825, 0.0
          %v842 = vmax.f32 %v826, 0.0
          %v843 = vmax.f32 %v827, 0.0
          %v844 = vmax.f32 %v828, 0.0
          %v845 = vmax.f32 %v829, 0.0
          %v846 = vmax.f32 %v830, 0.0
          %v847 = vmax.f32 %v831, 0.0
          %v848 = vmax.f32 %v832, 0.0
          %v849 = vmax.f32 %v833, 0.0
          %v850 = vmax.f32 %v834, 0.0
          %v851 = vmax.f32 %v835, 0.0
          %v852 = vmax.f32 %v836, 0.0
          %853 = vst [vmem:[%s205] sm:$0xff] %v837
          %854 = vst [vmem:[%s205 + $0x8] sm:$0xff] %v838
          %855 = vst [vmem:[%s205 + $0x10] sm:$0xff] %v839
          %856 = vst [vmem:[%s205 + $0x18] sm:$0xff] %v840
          %857 = vst [vmem:[%s205 + $0x20] sm:$0xff] %v841
          %858 = vst [vmem:[%s205 + $0x28] sm:$0xff] %v842
          %859 = vst [vmem:[%s205 + $0x30] sm:$0xff] %v843
          %860 = vst [vmem:[%s205 + $0x38] sm:$0xff] %v844
          %861 = vst [vmem:[%s205 + $0x40] sm:$0xff] %v845
          %862 = vst [vmem:[%s205 + $0x48] sm:$0xff] %v846
          %863 = vst [vmem:[%s205 + $0x50] sm:$0xff] %v847
          %864 = vst [vmem:[%s205 + $0x58] sm:$0xff] %v848
          %865 = vst [vmem:[%s205 + $0x60] sm:$0xff] %v849
          %866 = vst [vmem:[%s205 + $0x68] sm:$0xff] %v850
          %867 = vst [vmem:[%s205 + $0x70] sm:$0xff] %v851
          %868 = vst [vmem:[%s205 + $0x78] sm:$0xff] %v852
        $region44: #{tpu_custom_call.1} parent=31 // pred_fallthru
          _
        %s869 = sand.u32 %s110, 1
        %s870 = scalar_lea.sflag [#allocation5], %s869
        %s871 = sand.u32 %s110, 1
        %s872 = smul.addr %s871, 128
        %s873 = scalar_lea.vmem [#allocation6], %s872
        // Predicated region
        $region45: #{tpu_custom_call.1} parent=31 // pred_check
          %p874 = pneg %p120
        $region46: #{tpu_custom_call.1} parent=31 // pred_check_branch
          %876 = sbr.rel (%p874) target = $region48
        $region47: #{tpu_custom_call.1} parent=31 // pred_region
          %s877 = smul.u32 16, %s24
          %s879 = ssub.s32 2048, 2048
          %880 = vsyncadd %s870, %s879
          %s881 = smul.addr %s877, 128
          %s882 = scalar_lea.hbm %s3, %s881
          %s883 = sshll.u32 %s873, 4
          %s884 = int_to_ptr.vmem [resolvable:$true] %s883
          %889 = dma.vmem_to_hbm [thread:$0]  %s884, 2048, %s882, %s870, 128, 128, 8
        $region48: #{tpu_custom_call.1} parent=31 // pred_fallthru
          _
      $region32: #{tpu_custom_call.1} parent=5 // pred_fallthru
        _
      %p890 = scmp.le.s32.totalorder 2, %s15
      // Predicated region
      $region49: #{tpu_custom_call.1} parent=5 // pred_check
        %p891 = pneg %p890
      $region50: #{tpu_custom_call.1} parent=5 // pred_check_branch
        %893 = sbr.rel (%p891) target = $region52
      $region51: #{tpu_custom_call.1} parent=5 // pred_region
        %s894 = ssub.s32 %s15, 2
        // Predicated region
        $region53: #{tpu_custom_call.1} parent=51 // pred_check
          %p895 = pneg %p126
        $region54: #{tpu_custom_call.1} parent=51 // pred_check_branch
          %897 = sbr.rel (%p895) target = $region56
        $region55: #{tpu_custom_call.1} parent=51 // pred_region
          %s898 = sand.u32 %s111, 1
          %s899 = scalar_lea.sflag [#allocation5], %s898
          %s900 = sand.u32 %s111, 1
          %s901 = smul.addr %s900, 128
          %s902 = scalar_lea.vmem [#allocation6], %s901
          %903 = dma.done %s899, 2048
        $region56: #{tpu_custom_call.1} parent=51 // pred_fallthru
          _
      $region52: #{tpu_custom_call.1} parent=5 // pred_fallthru
        _
    $region6: #{tpu_custom_call.1} parent=1 // loop_footer
      %s19 = sadd.s32 1, %s15
    $region7: #{tpu_custom_call.1} parent=1 // loop_footer_branch
      %14 = sbr.rel target = $region3
    $region8: #{tpu_custom_call.1} parent=1 // loop_exit
      _
    %904 = vsyncpa [#allocation4], 1
    %s905 = scalar_lea.sflag [#allocation4], 1
    %906 = vsyncpa %s905, 1
    %907 = vsyncpa [#allocation5], 1
    %s908 = scalar_lea.sflag [#allocation5], 1
    %909 = vsyncpa %s908, 1

</llo_original>
